<compile_context>
chip_gen: v7x
topology: tpu7x:2x2x1
jax: 0.10.0
libtpu: 0.0.40
codegen_flags: <defaults>
</compile_context>

<pallas_src>
import jax
import jax.numpy as jnp
import numpy as np
from jax.experimental import pallas as pl
from jax.experimental.pallas import tpu as pltpu


# ----------------- kernel 1: hoisted, row-tiled layer-0 input projection -----
def _input_proj_kernel(x_ref, w_ref, b_ref, o_ref):
    # (TM, Din) x (Din, H) per gate; gate-major output slabs, bf16 stream out.
    x = x_ref[...]                                            # (TM, Din) bf16
    for g in range(3):                                        # r, z, n
        o_ref[g] = (jnp.dot(x, w_ref[g], preferred_element_type=jnp.float32)
                    + b_ref[g]).astype(o_ref.dtype)


def input_projection(x_flat, wih0, bih0, *, tm=512):
    """x_flat: (T*B, Din) bf16, wih0: (3, Din, H) bf16, bih0: (3, 1, H) f32.

    Returns gi0: (3, T*B, H) bf16 == per-gate (x @ W_ih0 + b_ih0).
    """
    TB, Din = x_flat.shape
    H = wih0.shape[2]
    tm = max(8, min(tm, TB))
    n_pad = (-TB) % tm
    if n_pad:
        x_flat = jnp.pad(x_flat, ((0, n_pad), (0, 0)))
    TBp = TB + n_pad

    gi0 = pl.pallas_call(
        _input_proj_kernel,
        out_shape=jax.ShapeDtypeStruct((3, TBp, H), jnp.bfloat16),
        grid=(TBp // tm,),
        in_specs=[
            pl.BlockSpec((tm, Din), lambda m: (m, 0)),        # row tile of x
            pl.BlockSpec((3, Din, H), lambda m: (0, 0, 0)),   # weights resident
            pl.BlockSpec((3, 1, H), lambda m: (0, 0, 0)),
        ],
        out_specs=pl.BlockSpec((3, tm, H), lambda m: (0, m, 0)),
        compiler_params=pltpu.CompilerParams(
            dimension_semantics=("parallel",),
            vmem_limit_bytes=32 * 1024 * 1024),
    )(x_flat, wih0, bih0)
    if n_pad:
        gi0 = gi0[:, :TB, :]
    return gi0


# ----------------- kernel 2: chunk-streamed 2-layer GRU + mask/gather/l2norm -
def _gru_chunk_kernel(max_len_ref,                  # scalar prefetch (SMEM)
                      gi0_ref, len_ref,
                      whh0_ref, bhh0_ref,
                      wih1_ref, whh1_ref, bih1_ref, bhh1_ref,
                      seq_ref, out_ref,
                      h0_scr, h1_scr, last_scr):
    """One grid step = one chunk of TC timesteps.

    gi0_ref:  (3, TC, B, H) bf16 precomputed layer-0 input gates (streamed)
    len_ref:  (B, 1) int32 sequence lengths
    seq_ref:  (B, TC, H) f32 output chunk, zeroed for t >= length
    out_ref:  (B, H) f32   l2-normalized hidden at t = length-1 (written last)
    h0/h1/last scratch carry the recurrent state across chunks.
    """
    c = pl.program_id(0)
    n_chunks = pl.num_programs(0)
    TC = gi0_ref.shape[1]
    t0 = c * TC

    @pl.when(c == 0)
    def _init():
        h0_scr[...] = jnp.zeros_like(h0_scr)
        h1_scr[...] = jnp.zeros_like(h1_scr)
        last_scr[...] = jnp.zeros_like(last_scr)

    @pl.when(t0 < max_len_ref[0])
    def _run_chunk():
        lengths = len_ref[...]                              # (B, 1) int32
        h0 = h0_scr[...]
        h1 = h1_scr[...]
        last = last_scr[...]

        def cell(gi_r, gi_z, gi_n, h_prev, whh_ref, bhh_ref):
            # PyTorch GRU gate order [r, z, n]; weights indexed through the ref
            # at each use (no duplicated VMEM copy of the resident weights).
            hp = h_prev.astype(jnp.bfloat16)
            gh_r = jnp.dot(hp, whh_ref[0], preferred_element_type=jnp.float32) + bhh_ref[0]
            gh_z = jnp.dot(hp, whh_ref[1], preferred_element_type=jnp.float32) + bhh_ref[1]
            gh_n = jnp.dot(hp, whh_ref[2], preferred_element_type=jnp.float32) + bhh_ref[2]
            r = jax.nn.sigmoid(gi_r + gh_r)
            z = jax.nn.sigmoid(gi_z + gh_z)
            n = jnp.tanh(gi_n + r * gh_n)
            return (1.0 - z) * n + z * h_prev

        # Static Python loop over the chunk == bounded unroll of TC steps; the
        # chunk grid axis bounds live ranges / code size at production T.
        for tt in range(TC):
            # Layer 0: input gates precomputed by the projection kernel.
            h0 = cell(gi0_ref[0, tt].astype(jnp.float32),
                      gi0_ref[1, tt].astype(jnp.float32),
                      gi0_ref[2, tt].astype(jnp.float32),
                      h0, whh0_ref, bhh0_ref)
            # Layer 1: input gates depend on h0(t) -> stay in the recurrence.
            h0b = h0.astype(jnp.bfloat16)
            gi1_r = jnp.dot(h0b, wih1_ref[0], preferred_element_type=jnp.float32) + bih1_ref[0]
            gi1_z = jnp.dot(h0b, wih1_ref[1], preferred_element_type=jnp.float32) + bih1_ref[1]
            gi1_n = jnp.dot(h0b, wih1_ref[2], preferred_element_type=jnp.float32) + bih1_ref[2]
            h1 = cell(gi1_r, gi1_z, gi1_n, h1, whh1_ref, bhh1_ref)

            # pad_packed_sequence: zero outputs at t >= length, written straight
            # into the (B, TC, H) sublane/lane-dense output block.
            valid = (t0 + tt) < lengths                      # (B, 1) bool
            seq_ref[:, tt, :] = jnp.where(valid, h1, 0.0)
            # Capture h1 at the last valid step (t == length - 1).
            last = jnp.where((t0 + tt + 1) == lengths, h1, last)

        h0_scr[...] = h0
        h1_scr[...] = h1
        last_scr[...] = last

    @pl.when(t0 >= max_len_ref[0])
    def _pad_chunk():
        # Chunk is entirely past every sequence's length: outputs are zeros.
        seq_ref[...] = jnp.zeros_like(seq_ref)

    @pl.when(c == n_chunks - 1)
    def _finalize():
        # Fused l2norm of the gathered last-step output (rsqrt -> EUP slot).
        last = last_scr[...]
        ssq = jnp.sum(last * last, axis=1, keepdims=True)
        out_ref[...] = last * jax.lax.rsqrt(jnp.maximum(ssq, 1e-12))


def gru_encode(max_len, gi0, lengths_col, params, *, tc):
    """gi0: (3, T_pad, B, H) bf16 time-major gate slabs; returns
    seq (B, T_pad, H) f32 and out (B, H) f32."""
    _, T_pad, B, H = gi0.shape
    n_chunks = T_pad // tc
    whh0 = params["whh0"].astype(jnp.bfloat16)
    wih1 = params["wih1"].astype(jnp.bfloat16)
    whh1 = params["whh1"].astype(jnp.bfloat16)

    w_spec = pl.BlockSpec((3, H, H), lambda c, ml: (0, 0, 0))
    b_spec = pl.BlockSpec((3, 1, H), lambda c, ml: (0, 0, 0))

    grid_spec = pltpu.PrefetchScalarGridSpec(
        num_scalar_prefetch=1,                              # max(lengths) in SMEM
        grid=(n_chunks,),
        in_specs=[
            pl.BlockSpec((3, tc, B, H), lambda c, ml: (0, c, 0, 0)),  # gi0 chunk
            pl.BlockSpec((B, 1), lambda c, ml: (0, 0)),               # lengths
            w_spec, b_spec,                                           # layer 0 recurrent
            w_spec, w_spec, b_spec, b_spec,                           # layer 1
        ],
        out_specs=[
            pl.BlockSpec((B, tc, H), lambda c, ml: (0, c, 0)),        # seq chunk
            pl.BlockSpec((B, H), lambda c, ml: (0, 0)),               # final out
        ],
        scratch_shapes=[pltpu.VMEM((B, H), jnp.float32),   # h0
                        pltpu.VMEM((B, H), jnp.float32),   # h1
                        pltpu.VMEM((B, H), jnp.float32)],  # last-valid h1
    )
    # TODO(synk): add a leading batch-"parallel" grid axis (or pl.core_map over
    # a 2-core mesh) so v7x's 2nd TensorCore takes half the batch, and fold
    # batch sub-tiles so the per-step MXU M dim reaches 256 on v6e/v7x.
    seq, out = pl.pallas_call(
        _gru_chunk_kernel,
        out_shape=(jax.ShapeDtypeStruct((B, T_pad, H), jnp.float32),
                   jax.ShapeDtypeStruct((B, H), jnp.float32)),
        grid_spec=grid_spec,
        compiler_params=pltpu.CompilerParams(
            dimension_semantics=("arbitrary",),            # state carried over chunks
            vmem_limit_bytes=32 * 1024 * 1024),
    )(max_len, gi0, lengths_col,
      whh0, params["bhh0"], wih1, whh1, params["bih1"], params["bhh1"])
    return seq, out


# ----------------------------- EncoderText forward ---------------------------
def encoder_text_forward(x_ids, lengths, params, *, proj_rows=512, time_chunk=8):
    """x_ids: (B, T) int32, lengths: (B,) int32.

    Returns (out, padded):
      out:    (B, embed_size) L2-normalized last-valid-step GRU output
      padded: (B, T, embed_size) GRU outputs, zeroed past each sequence length
    """
    B, T = x_ids.shape
    H = params["whh0"].shape[-1]

    # Clamp lengths to T so `t == length-1` always fires (review concern).
    lengths = jnp.minimum(lengths.astype(jnp.int32), T)

    # Embedding gather directly in time-major row order (row = t*B + b).
    # TODO(synk): fuse this gather into the projection kernel (manual per-row
    # DMA gather on a pl.ANY embedding table) to avoid materializing x_flat.
    ids_tm = jnp.transpose(x_ids).reshape(-1)                       # (T*B,)
    x_flat = jnp.take(params["embed"], ids_tm, axis=0).astype(jnp.bfloat16)

    # Hoisted layer-0 input projection, row-tiled, gate-major bf16 output.
    wih0 = params["wih0"].astype(jnp.bfloat16)
    gi0 = input_projection(x_flat, wih0, params["bih0"], tm=proj_rows)
    gi0 = gi0.reshape(3, T, B, H)                                   # (3,T,B,H)

    # Pad time to a multiple of the chunk (chunks past max(lengths) are skipped
    # in-kernel and emit zeros).  time_chunk should be a multiple of 8.
    tc = max(1, min(time_chunk, T))
    t_pad = (-T) % tc
    if t_pad:
        gi0 = jnp.pad(gi0, ((0, 0), (0, t_pad), (0, 0), (0, 0)))

    lengths_col = lengths.reshape(B, 1)
    max_len = jnp.max(lengths).reshape(1)

    seq, out = gru_encode(max_len, gi0, lengths_col, params, tc=tc)
    if t_pad:
        seq = seq[:, :T, :]
    return out, seq                                                 # seq already (B,T,H)


# ----------------------------- parameter init --------------------------------
def init_params(key, vocab_size, word_dim, embed_size):
    ks = jax.random.split(key, 9)
    H = embed_size
    stdv = 1.0 / np.sqrt(H)  # PyTorch GRU default init
    u = lambda k, shape, a: jax.random.uniform(k, shape, jnp.float32, -a, a)
    return {
        # nn.Embedding init_weights(): uniform(-0.1, 0.1)
        "embed": u(ks[0], (vocab_size, word_dim), 0.1),
        # Gate-major ([r, z, n] slabs), transposed for x @ W on the MXU.
        "wih0": u(ks[1], (3, word_dim, H), stdv),
        "whh0": u(ks[2], (3, H, H), stdv),
        "bih0": u(ks[3], (3, 1, H), stdv),
        "bhh0": u(ks[4], (3, 1, H), stdv),
        "wih1": u(ks[5], (3, H, H), stdv),
        "whh1": u(ks[6], (3, H, H), stdv),
        "bih1": u(ks[7], (3, 1, H), stdv),
        "bhh1": u(ks[8], (3, 1, H), stdv),
    }


# ----------------------------- pure-JAX reference ----------------------------
def _reference_forward(x_ids, lengths, params):
    H = params["whh0"].shape[-1]
    B, T = x_ids.shape
    x_emb = jnp.take(params["embed"], x_ids, axis=0)
    hp = jax.lax.Precision.HIGHEST

    def gates(x, w, b):
        return [jnp.dot(x, w[g], precision=hp) + b[g] for g in range(3)]

    def cell(x, h, wih, whh, bih, bhh):
        gi = gates(x, wih, bih)
        gh = gates(h, whh, bhh)
        r = jax.nn.sigmoid(gi[0] + gh[0])
        z = jax.nn.sigmoid(gi[1] + gh[1])
        n = jnp.tanh(gi[2] + r * gh[2])
        return (1.0 - z) * n + z * h

    def step(carry, x_t):
        h0, h1 = carry
        h0 = cell(x_t, h0, params["wih0"], params["whh0"], params["bih0"], params["bhh0"])
        h1 = cell(h0, h1, params["wih1"], params["whh1"], params["bih1"], params["bhh1"])
        return (h0, h1), h1

    zeros = jnp.zeros((B, H), jnp.float32)
    _, seq = jax.lax.scan(step, (zeros, zeros), jnp.transpose(x_emb, (1, 0, 2)))
    seq = jnp.transpose(seq, (1, 0, 2))
    mask = jnp.arange(T)[None, :, None] < lengths[:, None, None]
    padded = jnp.where(mask, seq, 0.0)
    idx = jnp.broadcast_to((lengths - 1)[:, None, None], (B, 1, H))
    last = jnp.take_along_axis(padded, idx, axis=1)[:, 0, :]
    norm = jnp.sqrt(jnp.sum(last * last, axis=1, keepdims=True))
    return last / norm, padded


# ----------------------------- main ------------------------------------------
if __name__ == "__main__":
    VOCAB, WORD_DIM, EMBED_SIZE = 50, 16, 32
    B, T = 4, 16

    key = jax.random.PRNGKey(0)
    k_params, k_ids = jax.random.split(key)
    params = init_params(k_params, VOCAB, WORD_DIM, EMBED_SIZE)

    x_ids = jax.random.randint(k_ids, (B, T), 0, VOCAB, dtype=jnp.int32)
    lengths = jnp.array([16, 11, 7, 3], dtype=jnp.int32)

    # Small tiles so the toy run exercises both grids (projection: 2 row tiles,
    # GRU: 2 time chunks with carried state).
    out, padded = encoder_text_forward(x_ids, lengths, params,
                                       proj_rows=32, time_chunk=8)
    out = jax.block_until_ready(out)
    padded = jax.block_until_ready(padded)

    ref_out, ref_padded = _reference_forward(x_ids, lengths, params)

    assert out.shape == (B, EMBED_SIZE)
    assert padded.shape == (B, T, EMBED_SIZE)
    # Tolerance deliberately relaxed: kernel uses bf16 MXU operands (f32 acc),
    # reference uses f32 with Precision.HIGHEST.
    assert np.allclose(np.asarray(out), np.asarray(ref_out), atol=5e-2, rtol=5e-2), \
        float(np.max(np.abs(np.asarray(out) - np.asarray(ref_out))))
    assert np.allclose(np.asarray(padded), np.asarray(ref_padded), atol=5e-2, rtol=5e-2), \
        float(np.max(np.abs(np.asarray(padded) - np.asarray(ref_padded))))

    print("KERNEL_OK")
</pallas_src>

<mosaic_0001>
module attributes {stable_mosaic.version = 11 : i64} {
  func.func @_input_proj_kernel(%arg0: i32, %arg1: memref<32x16xbf16, #tpu.memory_space<vmem>>, %arg2: memref<3x16x32xbf16, #tpu.memory_space<vmem>>, %arg3: memref<3x1x32xf32, #tpu.memory_space<vmem>>, %arg4: memref<3x32x32xbf16, #tpu.memory_space<vmem>>) attributes {dimension_semantics = [#tpu.dimension_semantics<parallel>], iteration_bounds = array<i64: 2>, scalar_prefetch = 0 : i64, scratch_operands = 0 : i64, tpu.core_type = #tpu.core_type<tc>, window_params = [{transform_indices = @transform_0, window_bounds = array<i64: 32, 16>}, {pipeline_mode = #tpu.pipeline_mode<synchronous>, transform_indices = @transform_1, window_bounds = array<i64: 3, 16, 32>}, {pipeline_mode = #tpu.pipeline_mode<synchronous>, transform_indices = @transform_2, window_bounds = array<i64: 3, 1, 32>}, {transform_indices = @transform_3, window_bounds = array<i64: 3, 32, 32>}]} {
    %c0 = arith.constant 0 : index
    %c0_0 = arith.constant 0 : index
    %0 = vector.load %arg1[%c0, %c0_0] : memref<32x16xbf16, #tpu.memory_space<vmem>>, vector<32x16xbf16>
    %c0_1 = arith.constant 0 : index
    %c0_2 = arith.constant 0 : index
    %c0_3 = arith.constant 0 : index
    %1 = vector.load %arg2[%c0_1, %c0_2, %c0_3] : memref<3x16x32xbf16, #tpu.memory_space<vmem>>, vector<1x16x32xbf16>
    %2 = vector.shape_cast %1 : vector<1x16x32xbf16> to vector<16x32xbf16>
    %cst = arith.constant dense<0.000000e+00> : vector<32x32xf32>
    %3 = tpu.matmul %0, %2, %cst {dimension_numbers = #tpu.dot_dimension_numbers<[1], [0], [0], [1], [0, 0, 1, 1], [], []>} : vector<32x16xbf16>, vector<16x32xbf16>, vector<32x32xf32> -> vector<32x32xf32>
    %c0_4 = arith.constant 0 : index
    %c0_5 = arith.constant 0 : index
    %c0_6 = arith.constant 0 : index
    %4 = vector.load %arg3[%c0_4, %c0_5, %c0_6] : memref<3x1x32xf32, #tpu.memory_space<vmem>>, vector<1x1x32xf32>
    %5 = vector.shape_cast %4 : vector<1x1x32xf32> to vector<1x32xf32>
    %6 = vector.broadcast %5 : vector<1x32xf32> to vector<32x32xf32>
    %7 = arith.addf %3, %6 : vector<32x32xf32>
    %8 = arith.truncf %7 : vector<32x32xf32> to vector<32x32xbf16>
    %c0_7 = arith.constant 0 : index
    %c0_8 = arith.constant 0 : index
    %c0_9 = arith.constant 0 : index
    %9 = vector.load %arg4[%c0_7, %c0_8, %c0_9] : memref<3x32x32xbf16, #tpu.memory_space<vmem>>, vector<1x32x32xbf16>
    %10 = vector.shape_cast %9 : vector<1x32x32xbf16> to vector<32x32xbf16>
    %11 = vector.shape_cast %8 : vector<32x32xbf16> to vector<1x32x32xbf16>
    tpu.vector_store %arg4[%c0_7, %c0_8, %c0_9], %11 {strides = array<i32>} : memref<3x32x32xbf16, #tpu.memory_space<vmem>>, vector<1x32x32xbf16>,
    %c1 = arith.constant 1 : index
    %c0_10 = arith.constant 0 : index
    %c0_11 = arith.constant 0 : index
    %12 = vector.load %arg2[%c1, %c0_10, %c0_11] : memref<3x16x32xbf16, #tpu.memory_space<vmem>>, vector<1x16x32xbf16>
    %13 = vector.shape_cast %12 : vector<1x16x32xbf16> to vector<16x32xbf16>
    %cst_12 = arith.constant dense<0.000000e+00> : vector<32x32xf32>
    %14 = tpu.matmul %0, %13, %cst_12 {dimension_numbers = #tpu.dot_dimension_numbers<[1], [0], [0], [1], [0, 0, 1, 1], [], []>} : vector<32x16xbf16>, vector<16x32xbf16>, vector<32x32xf32> -> vector<32x32xf32>
    %c1_13 = arith.constant 1 : index
    %c0_14 = arith.constant 0 : index
    %c0_15 = arith.constant 0 : index
    %15 = vector.load %arg3[%c1_13, %c0_14, %c0_15] : memref<3x1x32xf32, #tpu.memory_space<vmem>>, vector<1x1x32xf32>
    %16 = vector.shape_cast %15 : vector<1x1x32xf32> to vector<1x32xf32>
    %17 = vector.broadcast %16 : vector<1x32xf32> to vector<32x32xf32>
    %18 = arith.addf %14, %17 : vector<32x32xf32>
    %19 = arith.truncf %18 : vector<32x32xf32> to vector<32x32xbf16>
    %c1_16 = arith.constant 1 : index
    %c0_17 = arith.constant 0 : index
    %c0_18 = arith.constant 0 : index
    %20 = vector.load %arg4[%c1_16, %c0_17, %c0_18] : memref<3x32x32xbf16, #tpu.memory_space<vmem>>, vector<1x32x32xbf16>
    %21 = vector.shape_cast %20 : vector<1x32x32xbf16> to vector<32x32xbf16>
    %22 = vector.shape_cast %19 : vector<32x32xbf16> to vector<1x32x32xbf16>
    tpu.vector_store %arg4[%c1_16, %c0_17, %c0_18], %22 {strides = array<i32>} : memref<3x32x32xbf16, #tpu.memory_space<vmem>>, vector<1x32x32xbf16>,
    %c2 = arith.constant 2 : index
    %c0_19 = arith.constant 0 : index
    %c0_20 = arith.constant 0 : index
    %23 = vector.load %arg2[%c2, %c0_19, %c0_20] : memref<3x16x32xbf16, #tpu.memory_space<vmem>>, vector<1x16x32xbf16>
    %24 = vector.shape_cast %23 : vector<1x16x32xbf16> to vector<16x32xbf16>
    %cst_21 = arith.constant dense<0.000000e+00> : vector<32x32xf32>
    %25 = tpu.matmul %0, %24, %cst_21 {dimension_numbers = #tpu.dot_dimension_numbers<[1], [0], [0], [1], [0, 0, 1, 1], [], []>} : vector<32x16xbf16>, vector<16x32xbf16>, vector<32x32xf32> -> vector<32x32xf32>
    %c2_22 = arith.constant 2 : index
    %c0_23 = arith.constant 0 : index
    %c0_24 = arith.constant 0 : index
    %26 = vector.load %arg3[%c2_22, %c0_23, %c0_24] : memref<3x1x32xf32, #tpu.memory_space<vmem>>, vector<1x1x32xf32>
    %27 = vector.shape_cast %26 : vector<1x1x32xf32> to vector<1x32xf32>
    %28 = vector.broadcast %27 : vector<1x32xf32> to vector<32x32xf32>
    %29 = arith.addf %25, %28 : vector<32x32xf32>
    %30 = arith.truncf %29 : vector<32x32xf32> to vector<32x32xbf16>
    %c2_25 = arith.constant 2 : index
    %c0_26 = arith.constant 0 : index
    %c0_27 = arith.constant 0 : index
    %31 = vector.load %arg4[%c2_25, %c0_26, %c0_27] : memref<3x32x32xbf16, #tpu.memory_space<vmem>>, vector<1x32x32xbf16>
    %32 = vector.shape_cast %31 : vector<1x32x32xbf16> to vector<32x32xbf16>
    %33 = vector.shape_cast %30 : vector<32x32xbf16> to vector<1x32x32xbf16>
    tpu.vector_store %arg4[%c2_25, %c0_26, %c0_27], %33 {strides = array<i32>} : memref<3x32x32xbf16, #tpu.memory_space<vmem>>, vector<1x32x32xbf16>,
    return
  }
  func.func @transform_0(%arg0: i32) -> (i32, i32) {
    %c0_i32 = arith.constant 0 : i32
    %c0_i32_0 = arith.constant 0 : i32
    return %arg0, %c0_i32 : i32, i32
  }
  func.func @transform_1(%arg0: i32) -> (i32, i32, i32) {
    %c0_i32 = arith.constant 0 : i32
    %c0_i32_0 = arith.constant 0 : i32
    %c0_i32_1 = arith.constant 0 : i32
    %c0_i32_2 = arith.constant 0 : i32
    return %c0_i32, %c0_i32_0, %c0_i32_1 : i32, i32, i32
  }
  func.func @transform_2(%arg0: i32) -> (i32, i32, i32) {
    %c0_i32 = arith.constant 0 : i32
    %c0_i32_0 = arith.constant 0 : i32
    %c0_i32_1 = arith.constant 0 : i32
    %c0_i32_2 = arith.constant 0 : i32
    return %c0_i32, %c0_i32_0, %c0_i32_1 : i32, i32, i32
  }
  func.func @transform_3(%arg0: i32) -> (i32, i32, i32) {
    %c0_i32 = arith.constant 0 : i32
    %c0_i32_0 = arith.constant 0 : i32
    %c0_i32_1 = arith.constant 0 : i32
    return %c0_i32, %arg0, %c0_i32_0 : i32, i32, i32
  }
}

</mosaic_0001>

<llo_original>
// kernel: tpu_custom_call.1
$region0: #{tpu_custom_call.1}
  #allocation0 [shape = 'u32[]', space=smem, size = 0x4, offset = 0x4, fixed_abs, tag = 'smem constant byte address 0x4 - core index']
  #allocation1 [shape = 'u32[144,128]{1,0:T(1,128)}', space=vmem, size = 0x12000, scoped, tag = 'internal scratch']
  %s0 = inlined_call_operand.vmem [shape: bf16[64,16], index: 0, kind: input, shape index: {}]
  %s1 = inlined_call_operand.vmem [shape: bf16[3,16,32], index: 1, kind: input, shape index: {}]
  %s2 = inlined_call_operand.vmem [shape: f32[3,1,32], index: 2, kind: input, shape index: {}]
  %s3 = inlined_call_operand.vmem [shape: bf16[3,64,32], index: 3, kind: output, shape index: {}]
  %s4 = sld [smem:[#allocation0]]
  $region82: #{tpu_custom_call.1} parent=0
    _
  %s6 = ssub.s32 1, %s4
  %s7 = scalar_select 0, %s6, %s4
  $region1: #{tpu_custom_call.1} parent=0
    #allocation2 [shape = 'u8[49152]{0}', space=vmem, size = 0xc000, scoped, tag = 'output window, operand 0']
    loop: start=0, step=1, limit=4
    $region2: #{tpu_custom_call.1} parent=1 // loop_pre_header
      _
    $region3: #{tpu_custom_call.1} parent=1 // loop_header
      %s9 = sphi 0, %s13
      %p10 = scmp.ge.s32.totalorder %s9, 4
      %s19 = sphi 0, %s21
      %s22 = sphi 0, %s19
      %s23 = sphi 0, %s22
      %s39 = sphi 0, %s23
      %s43 = sphi 0, %s43
      %s45 = sphi 0, %s43
      %s46 = sphi 0, %s45
      %s60 = sphi 0, %s46
      %s64 = sphi 0, %s64
      %s66 = sphi 0, %s64
      %s67 = sphi 0, %s66
      %s81 = sphi 0, %s67
      %s87 = sphi 0, %s89
      %s90 = sphi 0, %s87
      %s91 = sphi 0, %s90
      %s107 = sphi 0, %s91
    $region4: #{tpu_custom_call.1} parent=1 // loop_header_branch
      %12 = sbr.rel (%p10) target = $region8
    $region5: #{tpu_custom_call.1} parent=1 // loop_body
      %s14 = ssub.s32 %s9, 1
      %s15 = ssub.s32 %s9, 2
      %s16 = sadd.s32 %s9, 1
      %s17 = ssub.s32 %s9, %s16
      %p18 = scmp.eq.s32.totalorder %s17, 0
      %s20 = sadd.s32 %s19, 1
      %s21 = scalar_select %p18, %s19, %s20
      %p24 = pneg %p18
      %p25 = scmp.eq.s32.totalorder %s9, 1
      %p26 = por %p24, %p25
      %p27 = scmp.ne.s32.totalorder %s19, %s22
      %p28 = scmp.eq.s32.totalorder %s9, 0
      %p29 = por %p27, %p28
      %p30 = scmp.ne.s32.totalorder %s19, %s22
      %p31 = scmp.eq.s32.totalorder %s14, 1
      %p32 = por %p30, %p31
      %p33 = scmp.ne.s32.totalorder %s22, %s23
      %p34 = scmp.eq.s32.totalorder %s14, 0
      %p35 = por %p33, %p34
      %p36 = scmp.ne.s32.totalorder %s22, %s23
      %p37 = scmp.eq.s32.totalorder %s15, 1
      %p38 = por %p36, %p37
      %p40 = scmp.ne.s32.totalorder %s23, %s39
      %p41 = scmp.eq.s32.totalorder %s15, 0
      %p42 = por %p40, %p41
      %s44 = sadd.s32 %s43, 1
      %p47 = scmp.eq.s32.totalorder %s9, 1
      %p48 = scmp.ne.s32.totalorder %s43, %s45
      %p49 = scmp.eq.s32.totalorder %s9, 0
      %p50 = por %p48, %p49
      %p51 = scmp.ne.s32.totalorder %s43, %s45
      %p52 = scmp.eq.s32.totalorder %s14, 1
      %p53 = por %p51, %p52
      %p54 = scmp.ne.s32.totalorder %s45, %s46
      %p55 = scmp.eq.s32.totalorder %s14, 0
      %p56 = por %p54, %p55
      %p57 = scmp.ne.s32.totalorder %s45, %s46
      %p58 = scmp.eq.s32.totalorder %s15, 1
      %p59 = por %p57, %p58
      %p61 = scmp.ne.s32.totalorder %s46, %s60
      %p62 = scmp.eq.s32.totalorder %s15, 0
      %p63 = por %p61, %p62
      %s65 = sadd.s32 %s64, 1
      %p68 = scmp.eq.s32.totalorder %s9, 1
      %p69 = scmp.ne.s32.totalorder %s64, %s66
      %p70 = scmp.eq.s32.totalorder %s9, 0
      %p71 = por %p69, %p70
      %p72 = scmp.ne.s32.totalorder %s64, %s66
      %p73 = scmp.eq.s32.totalorder %s14, 1
      %p74 = por %p72, %p73
      %p75 = scmp.ne.s32.totalorder %s66, %s67
      %p76 = scmp.eq.s32.totalorder %s14, 0
      %p77 = por %p75, %p76
      %p78 = scmp.ne.s32.totalorder %s66, %s67
      %p79 = scmp.eq.s32.totalorder %s15, 1
      %p80 = por %p78, %p79
      %p82 = scmp.ne.s32.totalorder %s67, %s81
      %p83 = scmp.eq.s32.totalorder %s15, 0
      %p84 = por %p82, %p83
      %s85 = ssub.s32 %s9, %s16
      %p86 = scmp.eq.s32.totalorder %s85, 0
      %s88 = sadd.s32 %s87, 1
      %s89 = scalar_select %p86, %s87, %s88
      %p92 = pneg %p86
      %p93 = scmp.eq.s32.totalorder %s9, 1
      %p94 = por %p92, %p93
      %p95 = scmp.ne.s32.totalorder %s87, %s90
      %p96 = scmp.eq.s32.totalorder %s9, 0
      %p97 = por %p95, %p96
      %p98 = scmp.ne.s32.totalorder %s87, %s90
      %p99 = scmp.eq.s32.totalorder %s14, 1
      %p100 = por %p98, %p99
      %p101 = scmp.ne.s32.totalorder %s90, %s91
      %p102 = scmp.eq.s32.totalorder %s14, 0
      %p103 = por %p101, %p102
      %p104 = scmp.ne.s32.totalorder %s90, %s91
      %p105 = scmp.eq.s32.totalorder %s15, 1
      %p106 = por %p104, %p105
      %p108 = scmp.ne.s32.totalorder %s91, %s107
      %p109 = scmp.eq.s32.totalorder %s15, 0
      %p110 = por %p108, %p109
      %p111 = scmp.le.s32.totalorder 1, %s9
      %p112 = scmp.lt.s32.totalorder %s9, 3
      %p113 = pnand %p111, %p112
      %p114 = pneg %p113
      // Predicated region
      $region9: #{tpu_custom_call.1} parent=5 // pred_check
        _
      $region10: #{tpu_custom_call.1} parent=5 // pred_check_branch
        %116 = sbr.rel (%p113) target = $region12
      $region11: #{tpu_custom_call.1} parent=5 // pred_region
        %s117 = ssub.s32 %s9, 1
        // Predicated region
        $region13: #{tpu_custom_call.1} parent=11 // pred_check
          %p118 = pneg %p56
        $region14: #{tpu_custom_call.1} parent=11 // pred_check_branch
          %120 = sbr.rel (%p118) target = $region16
        $region15: #{tpu_custom_call.1} parent=11 // pred_region
          _
        $region16: #{tpu_custom_call.1} parent=11 // pred_fallthru
          _
        // Predicated region
        $region17: #{tpu_custom_call.1} parent=11 // pred_check
          %p121 = pneg %p77
        $region18: #{tpu_custom_call.1} parent=11 // pred_check_branch
          %123 = sbr.rel (%p121) target = $region20
        $region19: #{tpu_custom_call.1} parent=11 // pred_region
          _
        $region20: #{tpu_custom_call.1} parent=11 // pred_fallthru
          _
      $region12: #{tpu_custom_call.1} parent=5 // pred_fallthru
        _
      %p124 = scmp.lt.s32.totalorder %s9, 2
      // Predicated region
      $region21: #{tpu_custom_call.1} parent=5 // pred_check
        %p125 = pneg %p124
      $region22: #{tpu_custom_call.1} parent=5 // pred_check_branch
        %127 = sbr.rel (%p125) target = $region24
      $region23: #{tpu_custom_call.1} parent=5 // pred_region
        // Predicated region
        $region25: #{tpu_custom_call.1} parent=23 // pred_check
          %p128 = pneg %p29
        $region26: #{tpu_custom_call.1} parent=23 // pred_check_branch
          %130 = sbr.rel (%p128) target = $region28
        $region27: #{tpu_custom_call.1} parent=23 // pred_region
          %s131 = smul.u32 4, %s9
          %p132 = scmp.lt.s32.totalorder %s131, 7
          %s133 = scalar_select %p132, %s131, 7
          %s134 = smul.addr %s133, 4
          %s135 = scalar_lea.vmem %s0, %s134
          %s136 = smul.u32 4, %s9
        $region28: #{tpu_custom_call.1} parent=23 // pred_fallthru
          _
      $region24: #{tpu_custom_call.1} parent=5 // pred_fallthru
        _
      %p137 = scmp.le.s32.totalorder 1, %s9
      %p138 = scmp.lt.s32.totalorder %s9, 3
      %p139 = pnand %p137, %p138
      %p140 = pneg %p139
      // Predicated region
      $region29: #{tpu_custom_call.1} parent=5 // pred_check
        _
      $region30: #{tpu_custom_call.1} parent=5 // pred_check_branch
        %142 = sbr.rel (%p139) target = $region32
      $region31: #{tpu_custom_call.1} parent=5 // pred_region
        %s143 = ssub.s32 %s9, 1
        %s144 = smul.u32 4, %s14
        %p145 = scmp.lt.s32.totalorder %s144, 7
        %s146 = scalar_select %p145, %s144, 7
        %s147 = smul.addr %s146, 4
        %s148 = scalar_lea.vmem %s0, %s147
        %p149 = pneg %p35
        %p150 = pneg %p32
        %p151 = pneg %p56
        %p152 = pneg %p53
        %p153 = pneg %p77
        %p154 = pneg %p74
        %p155 = pneg %p103
        %p156 = pneg %p100
        %s157 = sand.u32 %s90, 1
        %s158 = sand.u32 %s90, 1
        %s159 = smul.addr %s158, 48
        %s160 = scalar_lea.vmem [#allocation2], %s159
        %s161 = smul.u32 4, %s14
        %p162 = scmp.lt.s32.totalorder %s161, 7
        %s163 = scalar_select %p162, %s161, 7
        %s164 = smul.addr %s163, 4
        %s165 = scalar_lea.vmem %s0, %s164
        %s166 = smul.u32 4, %s14
        %s167 = smul.u32 4, %s14
        %v169 = vld [vmem:[%s165] sm:$0xf]
        %v170 = vld [vmem:[%s165 + $0x4] sm:$0xf]
        %v171 = vld [vmem:[%s165 + $0x8] sm:$0xf]
        %v172 = vld [vmem:[%s165 + $0xc] sm:$0xf]
        %v173 = vld [vmem:[%s1] sm:$0xf]
        %v174 = vld [vmem:[%s1 + $0x4] sm:$0xf]
        %v175 = vld [vmem:[%s2] sm:$0x1]
        %v177 = vlaneseq
        %v178 = vshrl.u32 %v177, 7
        %v179 = vsub.s32 0, %v178
        %v180 = vrot.slane %v175, %v179
        %v186 = vunpack.c.l.b16 %v169
        %v187 = vunpack.c.l.b16 %v170
        %v188 = vunpack.c.l.b16 %v171
        %v189 = vunpack.c.l.b16 %v172
        %v190 = vpack.c.b16 %v187, %v186
        %v191 = vpack.c.b16 %v189, %v188
        %v194 = vunpack.c.l.b16 %v173
        %v195 = vunpack.c.l.b16 %v174
        %v196 = vpack.c.b16 %v195, %v194
        %vm198 = vcmask 130048
        %v200 = vsel %vm198, %v190, 0
        %v203 = vsel %vm198, %v191, 0
        %205 = vmatprep.subr.bf16.mxu0 0
        %206 = vmatpush1.bf16.msra.mxu0 %v196
        %207 = vmatprep.subr.bf16.mxu0 0
        %208 = vmatpush1.bf16.msra.mxu0 0
        %209 = vmatprep.subr.bf16.mxu0 0
        %210 = vmatpush1.bf16.msra.mxu0 0
        %211 = vmatprep.subr.bf16.mxu0 0
        %212 = vmatpush1.bf16.msra.mxu0 0
        %213 = vmatprep.subr.bf16.mxu0 0
        %214 = vmatpush1.bf16.msra.mxu0 0
        %215 = vmatprep.subr.bf16.mxu0 0
        %216 = vmatpush1.bf16.msra.mxu0 0
        %217 = vmatprep.subr.bf16.mxu0 0
        %218 = vmatpush1.bf16.msra.mxu0 0
        %219 = vmatprep.subr.bf16.mxu0 0
        %220 = vmatpush1.bf16.msra.mxu0 0
        %221 = vmatprep.subr.bf16.mxu0 0
        %222 = vmatpush1.bf16.msra.mxu0 0
        %223 = vmatprep.subr.bf16.mxu0 0
        %224 = vmatpush1.bf16.msra.mxu0 0
        %225 = vmatprep.subr.bf16.mxu0 0
        %226 = vmatpush1.bf16.msra.mxu0 0
        %227 = vmatprep.subr.bf16.mxu0 0
        %228 = vmatpush1.bf16.msra.mxu0 0
        %229 = vmatprep.subr.bf16.mxu0 0
        %230 = vmatpush1.bf16.msra.mxu0 0
        %231 = vmatprep.subr.bf16.mxu0 0
        %232 = vmatpush1.bf16.msra.mxu0 0
        %233 = vmatprep.subr.bf16.mxu0 0
        %234 = vmatpush1.bf16.msra.mxu0 0
        %235 = vmatprep.subr.bf16.mxu0 0
        %236 = vmatpush1.bf16.msra.mxu0 0
        %237 = vmatprep.mubr.bf16.mxu0 0
        %238 = vmatmul.mubr.bf16.gmra.mrb[0].mxu0 %v200
        %v239 = vpop.f32.mrb[0].mxu0
        %v240 = vadd.f32 %v180, %v239
        %v241 = vpop.f32.mrb[0].mxu0
        %v242 = vpop.f32.mrb[0].mxu0
        %v243 = vadd.f32 %v180, %v242
        %v244 = vpop.f32.mrb[0].mxu0
        %245 = vmatprep.mubr.bf16.mxu0 0
        %246 = vmatmul.mubr.bf16.gmra.mrb[0].mxu0 %v203
        %v247 = vpop.f32.mrb[0].mxu0
        %v248 = vadd.f32 %v180, %v247
        %v249 = vpop.f32.mrb[0].mxu0
        %v250 = vpop.f32.mrb[0].mxu0
        %v251 = vadd.f32 %v180, %v250
        %v252 = vpop.f32.mrb[0].mxu0
        %253 = vdwg.mxu0
        %v254 = vpack.c.bf16 %v243, %v240
        %v255 = vpack.c.bf16 %v251, %v248
        %v258 = vunpack.c.l.b16 %v254
        %v259 = vunpack.c.h.b16 %v254
        %v260 = vunpack.c.l.b16 %v255
        %v261 = vunpack.c.h.b16 %v255
        %v262 = vpack.c.b16 %v258, %v258
        %v263 = vpack.c.b16 %v259, %v259
        %v264 = vpack.c.b16 %v260, %v260
        %v265 = vpack.c.b16 %v261, %v261
        %vm270 = vcmask 257024
        %271 = vst.msk [vmem:[%s160] sm:$0xf] %vm270, %v262
        %272 = vst.msk [vmem:[%s160 + $0x4] sm:$0xf] %vm270, %v263
        %273 = vst.msk [vmem:[%s160 + $0x8] sm:$0xf] %vm270, %v264
        %274 = vst.msk [vmem:[%s160 + $0xc] sm:$0xf] %vm270, %v265
        %s275 = scalar_lea.vmem %s1, 8
        %v276 = vld [vmem:[%s275] sm:$0xf]
        %v277 = vld [vmem:[%s275 + $0x4] sm:$0xf]
        %s278 = scalar_lea.vmem %s2, 1
        %v279 = vld [vmem:[%s278] sm:$0x1]
        %v281 = vlaneseq
        %v282 = vshrl.u32 %v281, 7
        %v283 = vsub.s32 0, %v282
        %v284 = vrot.slane %v279, %v283
        %v288 = vunpack.c.l.b16 %v276
        %v289 = vunpack.c.l.b16 %v277
        %v290 = vpack.c.b16 %v289, %v288
        %292 = vmatprep.subr.bf16.mxu0 0
        %293 = vmatpush1.bf16.msra.mxu0 %v290
        %294 = vmatprep.subr.bf16.mxu0 0
        %295 = vmatpush1.bf16.msra.mxu0 0
        %296 = vmatprep.subr.bf16.mxu0 0
        %297 = vmatpush1.bf16.msra.mxu0 0
        %298 = vmatprep.subr.bf16.mxu0 0
        %299 = vmatpush1.bf16.msra.mxu0 0
        %300 = vmatprep.subr.bf16.mxu0 0
        %301 = vmatpush1.bf16.msra.mxu0 0
        %302 = vmatprep.subr.bf16.mxu0 0
        %303 = vmatpush1.bf16.msra.mxu0 0
        %304 = vmatprep.subr.bf16.mxu0 0
        %305 = vmatpush1.bf16.msra.mxu0 0
        %306 = vmatprep.subr.bf16.mxu0 0
        %307 = vmatpush1.bf16.msra.mxu0 0
        %308 = vmatprep.subr.bf16.mxu0 0
        %309 = vmatpush1.bf16.msra.mxu0 0
        %310 = vmatprep.subr.bf16.mxu0 0
        %311 = vmatpush1.bf16.msra.mxu0 0
        %312 = vmatprep.subr.bf16.mxu0 0
        %313 = vmatpush1.bf16.msra.mxu0 0
        %314 = vmatprep.subr.bf16.mxu0 0
        %315 = vmatpush1.bf16.msra.mxu0 0
        %316 = vmatprep.subr.bf16.mxu0 0
        %317 = vmatpush1.bf16.msra.mxu0 0
        %318 = vmatprep.subr.bf16.mxu0 0
        %319 = vmatpush1.bf16.msra.mxu0 0
        %320 = vmatprep.subr.bf16.mxu0 0
        %321 = vmatpush1.bf16.msra.mxu0 0
        %322 = vmatprep.subr.bf16.mxu0 0
        %323 = vmatpush1.bf16.msra.mxu0 0
        %324 = vmatprep.mubr.bf16.mxu0 0
        %325 = vmatmul.mubr.bf16.gmra.mrb[0].mxu0 %v200
        %v326 = vpop.f32.mrb[0].mxu0
        %v327 = vadd.f32 %v284, %v326
        %v328 = vpop.f32.mrb[0].mxu0
        %v329 = vpop.f32.mrb[0].mxu0
        %v330 = vadd.f32 %v284, %v329
        %v331 = vpop.f32.mrb[0].mxu0
        %332 = vmatprep.mubr.bf16.mxu0 0
        %333 = vmatmul.mubr.bf16.gmra.mrb[0].mxu0 %v203
        %v334 = vpop.f32.mrb[0].mxu0
        %v335 = vadd.f32 %v284, %v334
        %v336 = vpop.f32.mrb[0].mxu0
        %v337 = vpop.f32.mrb[0].mxu0
        %v338 = vadd.f32 %v284, %v337
        %v339 = vpop.f32.mrb[0].mxu0
        %340 = vdwg.mxu0
        %v341 = vpack.c.bf16 %v330, %v327
        %v342 = vpack.c.bf16 %v338, %v335
        %v345 = vunpack.c.l.b16 %v341
        %v346 = vunpack.c.h.b16 %v341
        %v347 = vunpack.c.l.b16 %v342
        %v348 = vunpack.c.h.b16 %v342
        %v349 = vpack.c.b16 %v345, %v345
        %v350 = vpack.c.b16 %v346, %v346
        %v351 = vpack.c.b16 %v347, %v347
        %v352 = vpack.c.b16 %v348, %v348
        %s357 = scalar_lea.vmem %s160, 16 [#allocation2]
        %358 = vst.msk [vmem:[%s357] sm:$0xf] %vm270, %v349
        %359 = vst.msk [vmem:[%s357 + $0x4] sm:$0xf] %vm270, %v350
        %360 = vst.msk [vmem:[%s357 + $0x8] sm:$0xf] %vm270, %v351
        %361 = vst.msk [vmem:[%s357 + $0xc] sm:$0xf] %vm270, %v352
        %s362 = scalar_lea.vmem %s1, 16
        %v363 = vld [vmem:[%s362] sm:$0xf]
        %v364 = vld [vmem:[%s362 + $0x4] sm:$0xf]
        %s365 = scalar_lea.vmem %s2, 2
        %v366 = vld [vmem:[%s365] sm:$0x1]
        %v368 = vlaneseq
        %v369 = vshrl.u32 %v368, 7
        %v370 = vsub.s32 0, %v369
        %v371 = vrot.slane %v366, %v370
        %v375 = vunpack.c.l.b16 %v363
        %v376 = vunpack.c.l.b16 %v364
        %v377 = vpack.c.b16 %v376, %v375
        %379 = vmatprep.subr.bf16.mxu0 0
        %380 = vmatpush1.bf16.msra.mxu0 %v377
        %381 = vmatprep.subr.bf16.mxu0 0
        %382 = vmatpush1.bf16.msra.mxu0 0
        %383 = vmatprep.subr.bf16.mxu0 0
        %384 = vmatpush1.bf16.msra.mxu0 0
        %385 = vmatprep.subr.bf16.mxu0 0
        %386 = vmatpush1.bf16.msra.mxu0 0
        %387 = vmatprep.subr.bf16.mxu0 0
        %388 = vmatpush1.bf16.msra.mxu0 0
        %389 = vmatprep.subr.bf16.mxu0 0
        %390 = vmatpush1.bf16.msra.mxu0 0
        %391 = vmatprep.subr.bf16.mxu0 0
        %392 = vmatpush1.bf16.msra.mxu0 0
        %393 = vmatprep.subr.bf16.mxu0 0
        %394 = vmatpush1.bf16.msra.mxu0 0
        %395 = vmatprep.subr.bf16.mxu0 0
        %396 = vmatpush1.bf16.msra.mxu0 0
        %397 = vmatprep.subr.bf16.mxu0 0
        %398 = vmatpush1.bf16.msra.mxu0 0
        %399 = vmatprep.subr.bf16.mxu0 0
        %400 = vmatpush1.bf16.msra.mxu0 0
        %401 = vmatprep.subr.bf16.mxu0 0
        %402 = vmatpush1.bf16.msra.mxu0 0
        %403 = vmatprep.subr.bf16.mxu0 0
        %404 = vmatpush1.bf16.msra.mxu0 0
        %405 = vmatprep.subr.bf16.mxu0 0
        %406 = vmatpush1.bf16.msra.mxu0 0
        %407 = vmatprep.subr.bf16.mxu0 0
        %408 = vmatpush1.bf16.msra.mxu0 0
        %409 = vmatprep.subr.bf16.mxu0 0
        %410 = vmatpush1.bf16.msra.mxu0 0
        %411 = vmatprep.mubr.bf16.mxu0 0
        %412 = vmatmul.mubr.bf16.gmra.mrb[0].mxu0 %v200
        %v413 = vpop.f32.mrb[0].mxu0
        %v414 = vadd.f32 %v371, %v413
        %v415 = vpop.f32.mrb[0].mxu0
        %v416 = vpop.f32.mrb[0].mxu0
        %v417 = vadd.f32 %v371, %v416
        %v418 = vpop.f32.mrb[0].mxu0
        %419 = vmatprep.mubr.bf16.mxu0 0
        %420 = vmatmul.mubr.bf16.gmra.mrb[0].mxu0 %v203
        %v421 = vpop.f32.mrb[0].mxu0
        %v422 = vadd.f32 %v371, %v421
        %v423 = vpop.f32.mrb[0].mxu0
        %v424 = vpop.f32.mrb[0].mxu0
        %v425 = vadd.f32 %v371, %v424
        %v426 = vpop.f32.mrb[0].mxu0
        %427 = vdwg.mxu0
        %v428 = vpack.c.bf16 %v417, %v414
        %v429 = vpack.c.bf16 %v425, %v422
        %v432 = vunpack.c.l.b16 %v428
        %v433 = vunpack.c.h.b16 %v428
        %v434 = vunpack.c.l.b16 %v429
        %v435 = vunpack.c.h.b16 %v429
        %v436 = vpack.c.b16 %v432, %v432
        %v437 = vpack.c.b16 %v433, %v433
        %v438 = vpack.c.b16 %v434, %v434
        %v439 = vpack.c.b16 %v435, %v435
        %s444 = scalar_lea.vmem %s160, 32 [#allocation2]
        %445 = vst.msk [vmem:[%s444] sm:$0xf] %vm270, %v436
        %446 = vst.msk [vmem:[%s444 + $0x4] sm:$0xf] %vm270, %v437
        %447 = vst.msk [vmem:[%s444 + $0x8] sm:$0xf] %vm270, %v438
        %448 = vst.msk [vmem:[%s444 + $0xc] sm:$0xf] %vm270, %v439
        %s449 = sand.u32 %s90, 1
        %s450 = sand.u32 %s90, 1
        %s451 = smul.addr %s450, 48
        %s452 = scalar_lea.vmem [#allocation2], %s451
        // Predicated region
        $region33: #{tpu_custom_call.1} parent=31 // pred_check
          %p453 = pneg %p100
        $region34: #{tpu_custom_call.1} parent=31 // pred_check_branch
          %455 = sbr.rel (%p453) target = $region36
        $region35: #{tpu_custom_call.1} parent=31 // pred_region
          %s456 = smul.u32 4, %s14
          %s457 = smul.addr %s456, 4
          %s458 = scalar_lea.vmem %s3, %s457
          // Predicated region
          $region37: #{tpu_custom_call.1} parent=35 // pred_check
            _
          $region38: #{tpu_custom_call.1} parent=35 // pred_check_branch
            %460 = sbr.rel (0) target = $region40
          $region39: #{tpu_custom_call.1} parent=35 // pred_region
            // Predicated region
            $region41: #{tpu_custom_call.1} parent=39 // pred_check
              _
            $region42: #{tpu_custom_call.1} parent=39 // pred_check_branch
              %462 = sbr.rel target = $region44
            $region43: #{tpu_custom_call.1} parent=39 // pred_region
              // Predicated region
              $region56: #{tpu_custom_call.1} parent=43 // pred_check
                _
              $region57: #{tpu_custom_call.1} parent=43 // pred_check_branch
                %499 = sbr.rel (0) target = $region59
              $region58: #{tpu_custom_call.1} parent=43 // pred_region
                loop: start=0, step=1, limit=1
                $region60: #{tpu_custom_call.1} parent=58 // loop_pre_header
                  _
                $region61: #{tpu_custom_call.1} parent=58 // loop_header
                  %s501 = sphi 0, %s505
                  %p502 = scmp.ge.s32.totalorder %s501, 1
                  %s506 = sphi %s452, %s452
                  %s507 = sphi %s458, %s458
                $region62: #{tpu_custom_call.1} parent=58 // loop_header_branch
                  %504 = sbr.rel (%p502) target = $region66
                $region63: #{tpu_custom_call.1} parent=58 // loop_body
                  _
                $region64: #{tpu_custom_call.1} parent=58 // loop_footer
                  %s505 = sadd.s32 1, %s501
                $region65: #{tpu_custom_call.1} parent=58 // loop_footer_branch
                  %500 = sbr.rel target = $region61
                $region66: #{tpu_custom_call.1} parent=58 // loop_exit
                  _
                loop: start=0, step=1, limit=1
                $region67: #{tpu_custom_call.1} parent=58 // loop_pre_header
                  _
                $region68: #{tpu_custom_call.1} parent=58 // loop_header
                  %s510 = sphi 0, %s514
                  %p511 = scmp.ge.s32.totalorder %s510, 1
                  %s515 = sphi %s452, %s452
                  %s516 = sphi %s458, %s458
                $region69: #{tpu_custom_call.1} parent=58 // loop_header_branch
                  %513 = sbr.rel (%p511) target = $region73
                $region70: #{tpu_custom_call.1} parent=58 // loop_body
                  %v517 = vld [vmem:[%s515] sm:$0xf]
                  %518 = vst [vmem:[%s516] sm:$0xf] %v517
                  %v519 = vld [vmem:[%s515 + $0x4] sm:$0xf]
                  %520 = vst [vmem:[%s516 + $0x4] sm:$0xf] %v519
                  %v521 = vld [vmem:[%s515 + $0x8] sm:$0xf]
                  %522 = vst [vmem:[%s516 + $0x8] sm:$0xf] %v521
                  %v523 = vld [vmem:[%s515 + $0xc] sm:$0xf]
                  %524 = vst [vmem:[%s516 + $0xc] sm:$0xf] %v523
                  %v525 = vld [vmem:[%s515 + $0x10] sm:$0xf]
                  %526 = vst [vmem:[%s516 + $0x20] sm:$0xf] %v525
                  %v527 = vld [vmem:[%s515 + $0x14] sm:$0xf]
                  %528 = vst [vmem:[%s516 + $0x24] sm:$0xf] %v527
                  %v529 = vld [vmem:[%s515 + $0x18] sm:$0xf]
                  %530 = vst [vmem:[%s516 + $0x28] sm:$0xf] %v529
                  %v531 = vld [vmem:[%s515 + $0x1c] sm:$0xf]
                  %532 = vst [vmem:[%s516 + $0x2c] sm:$0xf] %v531
                  %v533 = vld [vmem:[%s515 + $0x20] sm:$0xf]
                  %534 = vst [vmem:[%s516 + $0x40] sm:$0xf] %v533
                  %v535 = vld [vmem:[%s515 + $0x24] sm:$0xf]
                  %536 = vst [vmem:[%s516 + $0x44] sm:$0xf] %v535
                  %v537 = vld [vmem:[%s515 + $0x28] sm:$0xf]
                  %538 = vst [vmem:[%s516 + $0x48] sm:$0xf] %v537
                  %v539 = vld [vmem:[%s515 + $0x2c] sm:$0xf]
                  %540 = vst [vmem:[%s516 + $0x4c] sm:$0xf] %v539
                $region71: #{tpu_custom_call.1} parent=58 // loop_footer
                  %s514 = sadd.s32 1, %s510
                $region72: #{tpu_custom_call.1} parent=58 // loop_footer_branch
                  %509 = sbr.rel target = $region68
                $region73: #{tpu_custom_call.1} parent=58 // loop_exit
                  _
              $region59: #{tpu_custom_call.1} parent=43 // pred_fallthru
                _
            $region44: #{tpu_custom_call.1} parent=39 // pred_fallthru
              _
            // Predicated region
            $region45: #{tpu_custom_call.1} parent=39 // pred_check
              _
            $region46: #{tpu_custom_call.1} parent=39 // pred_check_branch
              %464 = sbr.rel (0) target = $region48
            $region47: #{tpu_custom_call.1} parent=39 // pred_region
              loop: start=0, step=1, limit=1
              $region49: #{tpu_custom_call.1} parent=47 // loop_pre_header
                _
              $region50: #{tpu_custom_call.1} parent=47 // loop_header
                %s467 = sphi 0, %s471
                %p468 = scmp.ge.s32.totalorder %s467, 1
                %s472 = sphi %s452, %s452
                %s473 = sphi %s458, %s458
              $region51: #{tpu_custom_call.1} parent=47 // loop_header_branch
                %470 = sbr.rel (%p468) target = $region55
              $region52: #{tpu_custom_call.1} parent=47 // loop_body
                %v474 = vld [vmem:[%s472] sm:$0xf]
                %475 = vst [vmem:[%s473] sm:$0xf] %v474
                %v476 = vld [vmem:[%s472 + $0x4] sm:$0xf]
                %477 = vst [vmem:[%s473 + $0x4] sm:$0xf] %v476
                %v478 = vld [vmem:[%s472 + $0x8] sm:$0xf]
                %479 = vst [vmem:[%s473 + $0x8] sm:$0xf] %v478
                %v480 = vld [vmem:[%s472 + $0xc] sm:$0xf]
                %481 = vst [vmem:[%s473 + $0xc] sm:$0xf] %v480
                %v482 = vld [vmem:[%s472 + $0x10] sm:$0xf]
                %483 = vst [vmem:[%s473 + $0x20] sm:$0xf] %v482
                %v484 = vld [vmem:[%s472 + $0x14] sm:$0xf]
                %485 = vst [vmem:[%s473 + $0x24] sm:$0xf] %v484
                %v486 = vld [vmem:[%s472 + $0x18] sm:$0xf]
                %487 = vst [vmem:[%s473 + $0x28] sm:$0xf] %v486
                %v488 = vld [vmem:[%s472 + $0x1c] sm:$0xf]
                %489 = vst [vmem:[%s473 + $0x2c] sm:$0xf] %v488
                %v490 = vld [vmem:[%s472 + $0x20] sm:$0xf]
                %491 = vst [vmem:[%s473 + $0x40] sm:$0xf] %v490
                %v492 = vld [vmem:[%s472 + $0x24] sm:$0xf]
                %493 = vst [vmem:[%s473 + $0x44] sm:$0xf] %v492
                %v494 = vld [vmem:[%s472 + $0x28] sm:$0xf]
                %495 = vst [vmem:[%s473 + $0x48] sm:$0xf] %v494
                %v496 = vld [vmem:[%s472 + $0x2c] sm:$0xf]
                %497 = vst [vmem:[%s473 + $0x4c] sm:$0xf] %v496
              $region53: #{tpu_custom_call.1} parent=47 // loop_footer
                %s471 = sadd.s32 1, %s467
              $region54: #{tpu_custom_call.1} parent=47 // loop_footer_branch
                %466 = sbr.rel target = $region50
              $region55: #{tpu_custom_call.1} parent=47 // loop_exit
                _
            $region48: #{tpu_custom_call.1} parent=39 // pred_fallthru
              _
          $region40: #{tpu_custom_call.1} parent=35 // pred_fallthru
            _
          %541 = vnop
        $region36: #{tpu_custom_call.1} parent=31 // pred_fallthru
          _
      $region32: #{tpu_custom_call.1} parent=5 // pred_fallthru
        _
      %p542 = scmp.le.s32.totalorder 2, %s9
      // Predicated region
      $region74: #{tpu_custom_call.1} parent=5 // pred_check
        %p543 = pneg %p542
      $region75: #{tpu_custom_call.1} parent=5 // pred_check_branch
        %545 = sbr.rel (%p543) target = $region77
      $region76: #{tpu_custom_call.1} parent=5 // pred_region
        %s546 = ssub.s32 %s9, 2
        // Predicated region
        $region78: #{tpu_custom_call.1} parent=76 // pred_check
          %p547 = pneg %p106
        $region79: #{tpu_custom_call.1} parent=76 // pred_check_branch
          %549 = sbr.rel (%p547) target = $region81
        $region80: #{tpu_custom_call.1} parent=76 // pred_region
          %s550 = sand.u32 %s91, 1
          %s551 = sand.u32 %s91, 1
          %s552 = smul.addr %s551, 48
          %s553 = scalar_lea.vmem [#allocation2], %s552
        $region81: #{tpu_custom_call.1} parent=76 // pred_fallthru
          _
      $region77: #{tpu_custom_call.1} parent=5 // pred_fallthru
        _
    $region6: #{tpu_custom_call.1} parent=1 // loop_footer
      %s13 = sadd.s32 1, %s9
    $region7: #{tpu_custom_call.1} parent=1 // loop_footer_branch
      %8 = sbr.rel target = $region3
    $region8: #{tpu_custom_call.1} parent=1 // loop_exit
      _

</llo_original>
